<compile_context>
chip_gen: v7x
topology: tpu7x:2x2x1
jax: 0.10.0
libtpu: 0.0.40
codegen_flags: <defaults>
</compile_context>

<pallas_src>
import math
import jax
import jax.numpy as jnp
from jax.experimental import pallas as pl
from jax.experimental.pallas import tpu as pltpu


def _round_up(x, m):
    return ((x + m - 1) // m) * m


def _ffn_kernel(x_ref, w_ref, b_ref, o_ref):
    # x_ref: (tm, E)  input rows tile, native dtype (cast to bf16 here, on-chip)
    # w_ref: (E, tn)  bf16 weight tile in (in, out) layout
    # b_ref: (1, tn)  f32 bias row
    # o_ref: (tm, tn) output tile
    x = x_ref[...].astype(jnp.bfloat16)
    y = jnp.dot(x, w_ref[...], preferred_element_type=jnp.float32)
    y = y + b_ref[...]
    o_ref[...] = jnp.maximum(y, 0.0).astype(o_ref.dtype)


def position_wise_feedforward(x, weight, bias, *, out_dtype=None):
    """x: [B, N, E].  weight: [E, E] (out, in) like torch. bias: [E]."""
    B, N, E = x.shape
    M = B * N
    out_dtype = x.dtype if out_dtype is None else out_dtype

    # One-time wrapper work (E^2, negligible vs M*E streaming): transpose the
    # torch (out, in) weight to (in, out) and cast to bf16 for the MXU.
    w_t = weight.T.astype(jnp.bfloat16)
    b2d = bias.reshape(1, E).astype(jnp.float32)
    x2d = x.reshape(M, E)                       # native dtype, cast in-kernel

    x_bytes = jnp.dtype(x2d.dtype).itemsize
    o_bytes = jnp.dtype(out_dtype).itemsize

    # ---- VMEM budget (generation aware) -------------------------------------
    try:
        vmem_cap = int(pltpu.get_tpu_info().vmem_capacity_bytes)
    except Exception:
        vmem_cap = 64 * 1024 * 1024             # conservative (v7x per-TC)
    budget = int(0.75 * vmem_cap)               # leave Mosaic internal headroom

    # ---- Output-column tiling: resident weight if it fits, else stream ------
    if E * E * 2 <= budget // 3:
        tn = E                                  # whole weight resident
        w_bufs = 1                              # single-buffered (constant idx)
    else:
        tn = max(128, min(E, ((budget // 6) // (E * 2)) // 128 * 128))
        w_bufs = 2                              # streamed -> keep double buffer

    # ---- Row tile from remaining VMEM ---------------------------------------
    remaining = max(budget - (w_bufs * E * tn * 2 + 2 * tn * 4), 1 << 20)
    per_row = 2 * (E * x_bytes) + 2 * (tn * o_bytes)   # dbl-buffered x + out
    tm = min(max(8, remaining // per_row), 1024)
    tm = max(8, (tm // 8) * 8)
    if tm >= 256:
        tm = (tm // 256) * 256                  # fill the 256x256 MXU (v6e/v7x)
    if tm >= M:
        if M >= 512:
            tm = _round_up(pl.cdiv(M, 2), 8)    # >=2 grid steps for megacore
        else:
            tm = M                              # full-extent block (small M)

    num_m = pl.cdiv(M, tm)
    num_n = pl.cdiv(E, tn)

    # VMEM limit: actual footprint with margin, never above chip-derived budget.
    act_bytes = 2 * tm * E * x_bytes + 2 * tm * tn * o_bytes
    w_bytes_tot = w_bufs * E * tn * 2 + 2 * tn * 4
    vmem_limit = int(min(max(32 * 1024 * 1024,
                             int((act_bytes + w_bytes_tot) * 1.25) + (2 << 20)),
                         budget))

    x_spec = pl.BlockSpec((tm, E), lambda i, j: (i, 0))
    out_spec = pl.BlockSpec((tm, tn), lambda i, j: (i, j))

    def _build_call(single_buffer_resident):
        if single_buffer_resident:
            w_spec = pl.BlockSpec((E, tn), lambda i, j: (0, j),
                                  pipeline_mode=pl.Buffered(1))
            b_spec = pl.BlockSpec((1, tn), lambda i, j: (0, j),
                                  pipeline_mode=pl.Buffered(1))
        else:
            w_spec = pl.BlockSpec((E, tn), lambda i, j: (0, j))
            b_spec = pl.BlockSpec((1, tn), lambda i, j: (0, j))
        return pl.pallas_call(
            _ffn_kernel,
            out_shape=jax.ShapeDtypeStruct((M, E), out_dtype),
            grid_spec=pltpu.PrefetchScalarGridSpec(
                num_scalar_prefetch=0,
                grid=(num_m, num_n),
                in_specs=[x_spec, w_spec, b_spec],
                out_specs=out_spec,
            ),
            compiler_params=pltpu.CompilerParams(
                dimension_semantics=("parallel", "parallel"),
                vmem_limit_bytes=vmem_limit,
            ),
        )

    if num_n == 1:
        # Constant-index weight/bias: single-buffer them (halves resident VMEM).
        try:
            out2d = _build_call(True)(x2d, w_t, b2d)
        except Exception:
            # Fallback if this Pallas build rejects Buffered(1): default
            # double-buffering (still correct, slightly more VMEM).
            out2d = _build_call(False)(x2d, w_t, b2d)
    else:
        out2d = _build_call(False)(x2d, w_t, b2d)

    return out2d.reshape(B, N, E)


def init_params(key, embed_dim):
    """Deterministic init mirroring the PyTorch module:
    every param ~ U(-stdv, stdv), stdv = 1/sqrt(param.size(-1)) = 1/sqrt(E)."""
    kw, kb = jax.random.split(key)
    stdv = 1.0 / math.sqrt(embed_dim)
    weight = jax.random.uniform(kw, (embed_dim, embed_dim),
                                minval=-stdv, maxval=stdv, dtype=jnp.float32)
    bias = jax.random.uniform(kb, (embed_dim,),
                              minval=-stdv, maxval=stdv, dtype=jnp.float32)
    return weight, bias


if __name__ == "__main__":
    key = jax.random.PRNGKey(0)
    k_x, k_p = jax.random.split(key)

    B, N, E = 2, 8, 128          # batch=2, seq/nodes=8, embed_dim=128
    x = jax.random.normal(k_x, (B, N, E), dtype=jnp.float32)
    weight, bias = init_params(k_p, E)

    out = position_wise_feedforward(x, weight, bias)
    out = jax.block_until_ready(out)

    # Reference (eval-mode dropout == identity): relu(x @ W^T + b).  Kernel uses
    # bf16 operands with f32 accumulation, so compare with bf16 tolerance.
    ref = jnp.maximum(jnp.einsum("bne,oe->bno", x, weight) + bias, 0.0)
    assert out.shape == (B, N, E)
    assert jnp.allclose(out, ref, atol=2e-2, rtol=2e-2)

    print("KERNEL_OK")
</pallas_src>

<mosaic_0001>
module attributes {stable_mosaic.version = 11 : i64} {
  func.func @_ffn_kernel(%arg0: i32, %arg1: i32, %arg2: memref<16x128xf32, #tpu.memory_space<vmem>>, %arg3: memref<128x128xbf16, #tpu.memory_space<vmem>>, %arg4: memref<1x128xf32, #tpu.memory_space<vmem>>, %arg5: memref<16x128xf32, #tpu.memory_space<vmem>>) attributes {dimension_semantics = [#tpu.dimension_semantics<parallel>, #tpu.dimension_semantics<parallel>], iteration_bounds = array<i64: 1, 1>, scalar_prefetch = 0 : i64, scratch_operands = 0 : i64, tpu.core_type = #tpu.core_type<tc>, window_params = [{transform_indices = @transform_0, window_bounds = array<i64: 16, 128>}, {pipeline_mode = #tpu.pipeline_mode<synchronous>, transform_indices = @transform_1, window_bounds = array<i64: 128, 128>}, {pipeline_mode = #tpu.pipeline_mode<synchronous>, transform_indices = @transform_2, window_bounds = array<i64: 1, 128>}, {transform_indices = @transform_3, window_bounds = array<i64: 16, 128>}]} {
    %c0 = arith.constant 0 : index
    %c0_0 = arith.constant 0 : index
    %0 = vector.load %arg2[%c0, %c0_0] : memref<16x128xf32, #tpu.memory_space<vmem>>, vector<16x128xf32>
    %1 = arith.truncf %0 : vector<16x128xf32> to vector<16x128xbf16>
    %c0_1 = arith.constant 0 : index
    %c0_2 = arith.constant 0 : index
    %2 = vector.load %arg3[%c0_1, %c0_2] : memref<128x128xbf16, #tpu.memory_space<vmem>>, vector<128x128xbf16>
    %cst = arith.constant dense<0.000000e+00> : vector<16x128xf32>
    %3 = tpu.matmul %1, %2, %cst {dimension_numbers = #tpu.dot_dimension_numbers<[1], [0], [0], [1], [0, 0, 1, 1], [], []>} : vector<16x128xbf16>, vector<128x128xbf16>, vector<16x128xf32> -> vector<16x128xf32>
    %c0_3 = arith.constant 0 : index
    %c0_4 = arith.constant 0 : index
    %4 = vector.load %arg4[%c0_3, %c0_4] : memref<1x128xf32, #tpu.memory_space<vmem>>, vector<1x128xf32>
    %5 = vector.broadcast %4 : vector<1x128xf32> to vector<16x128xf32>
    %6 = arith.addf %3, %5 : vector<16x128xf32>
    %cst_5 = arith.constant 0.000000e+00 : f32
    %7 = vector.broadcast %cst_5 : f32 to vector<16x128xf32>
    %8 = arith.maximumf %6, %7 : vector<16x128xf32>
    %c0_6 = arith.constant 0 : index
    %c0_7 = arith.constant 0 : index
    %9 = vector.load %arg5[%c0_6, %c0_7] : memref<16x128xf32, #tpu.memory_space<vmem>>, vector<16x128xf32>
    tpu.vector_store %arg5[%c0_6, %c0_7], %8 {strides = array<i32>} : memref<16x128xf32, #tpu.memory_space<vmem>>, vector<16x128xf32>,
    return
  }
  func.func @transform_0(%arg0: i32, %arg1: i32) -> (i32, i32) {
    %c0_i32 = arith.constant 0 : i32
    %c0_i32_0 = arith.constant 0 : i32
    return %arg0, %c0_i32 : i32, i32
  }
  func.func @transform_1(%arg0: i32, %arg1: i32) -> (i32, i32) {
    %c0_i32 = arith.constant 0 : i32
    %c0_i32_0 = arith.constant 0 : i32
    return %c0_i32, %arg1 : i32, i32
  }
  func.func @transform_2(%arg0: i32, %arg1: i32) -> (i32, i32) {
    %c0_i32 = arith.constant 0 : i32
    %c0_i32_0 = arith.constant 0 : i32
    return %c0_i32, %arg1 : i32, i32
  }
  func.func @transform_3(%arg0: i32, %arg1: i32) -> (i32, i32) {
    %c0_i32 = arith.constant 0 : i32
    return %arg0, %arg1 : i32, i32
  }
}

module attributes {stable_mosaic.version = 11 : i64} {
  func.func @_ffn_kernel(%arg0: i32, %arg1: i32, %arg2: memref<16x128xf32, #tpu.memory_space<vmem>>, %arg3: memref<128x128xbf16, #tpu.memory_space<vmem>>, %arg4: memref<1x128xf32, #tpu.memory_space<vmem>>, %arg5: memref<16x128xf32, #tpu.memory_space<vmem>>) attributes {dimension_semantics = [#tpu.dimension_semantics<parallel>, #tpu.dimension_semantics<parallel>], iteration_bounds = array<i64: 1, 1>, scalar_prefetch = 0 : i64, scratch_operands = 0 : i64, tpu.core_type = #tpu.core_type<tc>, window_params = [{transform_indices = @transform_0, window_bounds = array<i64: 16, 128>}, {transform_indices = @transform_1, window_bounds = array<i64: 128, 128>}, {transform_indices = @transform_2, window_bounds = array<i64: 1, 128>}, {transform_indices = @transform_3, window_bounds = array<i64: 16, 128>}]} {
    %c0 = arith.constant 0 : index
    %c0_0 = arith.constant 0 : index
    %0 = vector.load %arg2[%c0, %c0_0] : memref<16x128xf32, #tpu.memory_space<vmem>>, vector<16x128xf32>
    %1 = arith.truncf %0 : vector<16x128xf32> to vector<16x128xbf16>
    %c0_1 = arith.constant 0 : index
    %c0_2 = arith.constant 0 : index
    %2 = vector.load %arg3[%c0_1, %c0_2] : memref<128x128xbf16, #tpu.memory_space<vmem>>, vector<128x128xbf16>
    %cst = arith.constant dense<0.000000e+00> : vector<16x128xf32>
    %3 = tpu.matmul %1, %2, %cst {dimension_numbers = #tpu.dot_dimension_numbers<[1], [0], [0], [1], [0, 0, 1, 1], [], []>} : vector<16x128xbf16>, vector<128x128xbf16>, vector<16x128xf32> -> vector<16x128xf32>
    %c0_3 = arith.constant 0 : index
    %c0_4 = arith.constant 0 : index
    %4 = vector.load %arg4[%c0_3, %c0_4] : memref<1x128xf32, #tpu.memory_space<vmem>>, vector<1x128xf32>
    %5 = vector.broadcast %4 : vector<1x128xf32> to vector<16x128xf32>
    %6 = arith.addf %3, %5 : vector<16x128xf32>
    %cst_5 = arith.constant 0.000000e+00 : f32
    %7 = vector.broadcast %cst_5 : f32 to vector<16x128xf32>
    %8 = arith.maximumf %6, %7 : vector<16x128xf32>
    %c0_6 = arith.constant 0 : index
    %c0_7 = arith.constant 0 : index
    %9 = vector.load %arg5[%c0_6, %c0_7] : memref<16x128xf32, #tpu.memory_space<vmem>>, vector<16x128xf32>
    tpu.vector_store %arg5[%c0_6, %c0_7], %8 {strides = array<i32>} : memref<16x128xf32, #tpu.memory_space<vmem>>, vector<16x128xf32>,
    return
  }
  func.func @transform_0(%arg0: i32, %arg1: i32) -> (i32, i32) {
    %c0_i32 = arith.constant 0 : i32
    %c0_i32_0 = arith.constant 0 : i32
    return %arg0, %c0_i32 : i32, i32
  }
  func.func @transform_1(%arg0: i32, %arg1: i32) -> (i32, i32) {
    %c0_i32 = arith.constant 0 : i32
    %c0_i32_0 = arith.constant 0 : i32
    return %c0_i32, %arg1 : i32, i32
  }
  func.func @transform_2(%arg0: i32, %arg1: i32) -> (i32, i32) {
    %c0_i32 = arith.constant 0 : i32
    %c0_i32_0 = arith.constant 0 : i32
    return %c0_i32, %arg1 : i32, i32
  }
  func.func @transform_3(%arg0: i32, %arg1: i32) -> (i32, i32) {
    %c0_i32 = arith.constant 0 : i32
    return %arg0, %arg1 : i32, i32
  }
}

</mosaic_0001>

<llo_original>
// kernel: tpu_custom_call.1
$region0: #{tpu_custom_call.1}
  #allocation0 [shape = 'u32[]', space=smem, size = 0x4, offset = 0x4, fixed_abs, tag = 'smem constant byte address 0x4 - core index']
  #allocation1 [shape = 'u32[144,128]{1,0:T(1,128)}', space=vmem, size = 0x12000, scoped, tag = 'internal scratch']
  %s0 = inlined_call_operand.hbm [shape: f32[16,128], index: 0, kind: input, shape index: {}]
  %s1 = inlined_call_operand.hbm [shape: bf16[128,128], index: 1, kind: input, shape index: {}]
  %s2 = inlined_call_operand.vmem [shape: f32[1,128], index: 2, kind: input, shape index: {}]
  %s3 = inlined_call_operand.hbm [shape: f32[16,128], index: 3, kind: output, shape index: {}]
  %s4 = sld [smem:[#allocation0]]
  $region30: #{tpu_custom_call.1} parent=0
    _
  %s6 = ssub.s32 1, %s4
  %s7 = scalar_select 0, %s6, %s4
  $region1: #{tpu_custom_call.1} parent=0
    #allocation2 [shape = 'u8[8192]{0}', space=vmem, size = 0x2000, scoped, tag = 'input window, operand 0, single buffered']
    #allocation3 [shape = 's32[1]{0}', space=sflag, size = 0x4, scoped, tag = 'scoped memory for tpu_custom_call.1']
    #allocation4 [shape = 's32[1]{0}', space=sflag, size = 0x4, scoped, tag = 'scoped memory for tpu_custom_call.1']
    #allocation5 [shape = 'u8[32768]{0}', space=vmem, size = 0x8000, scoped, tag = 'input window, operand 1, single buffered']
    #allocation6 [shape = 's32[1]{0}', space=sflag, size = 0x4, scoped, tag = 'scoped memory for tpu_custom_call.1']
    #allocation7 [shape = 'u8[8192]{0}', space=vmem, size = 0x2000, scoped, tag = 'output window, operand 0, single buffered']
    %8 = vsyncpa [#allocation3], 0
    %9 = vsyncpa [#allocation6], 0
    %10 = vsyncpa [#allocation4], 0
    // Predicated region
    $region2: #{tpu_custom_call.1} parent=1 // pred_check
      _
    $region3: #{tpu_custom_call.1} parent=1 // pred_check_branch
      %12 = sbr.rel (0) target = $region5
    $region4: #{tpu_custom_call.1} parent=1 // pred_region
      %s14 = ssub.s32 256, 256
      %15 = vsyncadd [#allocation3], %s14
      %s16 = sshll.u32 [#allocation2], 4
      %s17 = int_to_ptr.vmem [resolvable:$true] %s16
      %22 = dma.hbm_to_vmem [thread:$0]  %s0, 256, %s17, [#allocation3], 128, 128, 8
    $region5: #{tpu_custom_call.1} parent=1 // pred_fallthru
      _
    // Predicated region
    $region6: #{tpu_custom_call.1} parent=1 // pred_check
      _
    $region7: #{tpu_custom_call.1} parent=1 // pred_check_branch
      %24 = sbr.rel (0) target = $region9
    $region8: #{tpu_custom_call.1} parent=1 // pred_region
      %s26 = ssub.s32 1024, 1024
      %27 = vsyncadd [#allocation6], %s26
      %s28 = sshll.u32 [#allocation5], 4
      %s29 = int_to_ptr.vmem [resolvable:$true] %s28
      %34 = dma.hbm_to_vmem [thread:$0]  %s1, 1024, %s29, [#allocation6], 64, 64, 4
    $region9: #{tpu_custom_call.1} parent=1 // pred_fallthru
      _
    // Predicated region
    $region10: #{tpu_custom_call.1} parent=1 // pred_check
      _
    $region11: #{tpu_custom_call.1} parent=1 // pred_check_branch
      %36 = sbr.rel (0) target = $region13
    $region12: #{tpu_custom_call.1} parent=1 // pred_region
      _
    $region13: #{tpu_custom_call.1} parent=1 // pred_fallthru
      _
    // Predicated region
    $region14: #{tpu_custom_call.1} parent=1 // pred_check
      _
    $region15: #{tpu_custom_call.1} parent=1 // pred_check_branch
      %38 = sbr.rel (0) target = $region17
    $region16: #{tpu_custom_call.1} parent=1 // pred_region
      %39 = dma.done [#allocation3], 256
    $region17: #{tpu_custom_call.1} parent=1 // pred_fallthru
      _
    // Predicated region
    $region18: #{tpu_custom_call.1} parent=1 // pred_check
      _
    $region19: #{tpu_custom_call.1} parent=1 // pred_check_branch
      %41 = sbr.rel (0) target = $region21
    $region20: #{tpu_custom_call.1} parent=1 // pred_region
      %42 = dma.done [#allocation6], 1024
    $region21: #{tpu_custom_call.1} parent=1 // pred_fallthru
      _
    %v44 = vld [vmem:[#allocation2] sm:$0xff]
    %v45 = vld [vmem:[#allocation2 + $0x8] sm:$0xff]
    %v46 = vpack.c.bf16 %v45, %v44
    %v47 = vld [vmem:[#allocation5] sm:$0xf]
    %v48 = vld [vmem:[#allocation5 + $0x4] sm:$0xf]
    %v49 = vld [vmem:[#allocation5 + $0x8] sm:$0xf]
    %v50 = vld [vmem:[#allocation5 + $0xc] sm:$0xf]
    %v51 = vld [vmem:[#allocation5 + $0x10] sm:$0xf]
    %v52 = vld [vmem:[#allocation5 + $0x14] sm:$0xf]
    %v53 = vld [vmem:[#allocation5 + $0x18] sm:$0xf]
    %v54 = vld [vmem:[#allocation5 + $0x1c] sm:$0xf]
    %v55 = vld [vmem:[#allocation5 + $0x20] sm:$0xf]
    %v56 = vld [vmem:[#allocation5 + $0x24] sm:$0xf]
    %v57 = vld [vmem:[#allocation5 + $0x28] sm:$0xf]
    %v58 = vld [vmem:[#allocation5 + $0x2c] sm:$0xf]
    %v59 = vld [vmem:[#allocation5 + $0x30] sm:$0xf]
    %v60 = vld [vmem:[#allocation5 + $0x34] sm:$0xf]
    %v61 = vld [vmem:[#allocation5 + $0x38] sm:$0xf]
    %v62 = vld [vmem:[#allocation5 + $0x3c] sm:$0xf]
    %v63 = vld [vmem:[%s2] sm:$0x1]
    %v65 = vlaneseq
    %v66 = vshrl.u32 %v65, 7
    %v67 = vsub.s32 0, %v66
    %v68 = vrot.slane %v63, %v67
    %v86 = vunpack.c.l.b16 %v47
    %v87 = vunpack.c.l.b16 %v48
    %v88 = vunpack.c.l.b16 %v49
    %v89 = vunpack.c.l.b16 %v50
    %v90 = vunpack.c.l.b16 %v51
    %v91 = vunpack.c.l.b16 %v52
    %v92 = vunpack.c.l.b16 %v53
    %v93 = vunpack.c.l.b16 %v54
    %v94 = vunpack.c.l.b16 %v55
    %v95 = vunpack.c.l.b16 %v56
    %v96 = vunpack.c.l.b16 %v57
    %v97 = vunpack.c.l.b16 %v58
    %v98 = vunpack.c.l.b16 %v59
    %v99 = vunpack.c.l.b16 %v60
    %v100 = vunpack.c.l.b16 %v61
    %v101 = vunpack.c.l.b16 %v62
    %v102 = vpack.c.b16 %v87, %v86
    %v103 = vpack.c.b16 %v89, %v88
    %v104 = vpack.c.b16 %v91, %v90
    %v105 = vpack.c.b16 %v93, %v92
    %v106 = vpack.c.b16 %v95, %v94
    %v107 = vpack.c.b16 %v97, %v96
    %v108 = vpack.c.b16 %v99, %v98
    %v109 = vpack.c.b16 %v101, %v100
    %118 = vmatprep.subr.bf16.mxu0 0
    %119 = vmatpush1.bf16.msra.mxu0 %v102
    %120 = vmatprep.subr.bf16.mxu0 0
    %121 = vmatpush1.bf16.msra.mxu0 %v103
    %122 = vmatprep.subr.bf16.mxu0 0
    %123 = vmatpush1.bf16.msra.mxu0 %v104
    %124 = vmatprep.subr.bf16.mxu0 0
    %125 = vmatpush1.bf16.msra.mxu0 %v105
    %126 = vmatprep.subr.bf16.mxu0 0
    %127 = vmatpush1.bf16.msra.mxu0 %v106
    %128 = vmatprep.subr.bf16.mxu0 0
    %129 = vmatpush1.bf16.msra.mxu0 %v107
    %130 = vmatprep.subr.bf16.mxu0 0
    %131 = vmatpush1.bf16.msra.mxu0 %v108
    %132 = vmatprep.subr.bf16.mxu0 0
    %133 = vmatpush1.bf16.msra.mxu0 %v109
    %134 = vmatprep.subr.bf16.mxu0 0
    %135 = vmatpush1.bf16.msra.mxu0 0
    %136 = vmatprep.subr.bf16.mxu0 0
    %137 = vmatpush1.bf16.msra.mxu0 0
    %138 = vmatprep.subr.bf16.mxu0 0
    %139 = vmatpush1.bf16.msra.mxu0 0
    %140 = vmatprep.subr.bf16.mxu0 0
    %141 = vmatpush1.bf16.msra.mxu0 0
    %142 = vmatprep.subr.bf16.mxu0 0
    %143 = vmatpush1.bf16.msra.mxu0 0
    %144 = vmatprep.subr.bf16.mxu0 0
    %145 = vmatpush1.bf16.msra.mxu0 0
    %146 = vmatprep.subr.bf16.mxu0 0
    %147 = vmatpush1.bf16.msra.mxu0 0
    %148 = vmatprep.subr.bf16.mxu0 0
    %149 = vmatpush1.bf16.msra.mxu0 0
    %150 = vmatprep.mubr.bf16.mxu0 0
    %151 = vmatmul.mubr.bf16.gmra.mrb[0].mxu0 %v46
    %v152 = vpop.f32.mrb[0].mxu0
    %v153 = vadd.f32 %v68, %v152
    %v154 = vpop.f32.mrb[0].mxu0
    %v155 = vpop.f32.mrb[0].mxu0
    %v156 = vadd.f32 %v68, %v155
    %v157 = vpop.f32.mrb[0].mxu0
    %158 = vdwg.mxu0
    %v159 = vmax.f32 %v153, 0.0
    %v160 = vmax.f32 %v156, 0.0
    %161 = vst [vmem:[#allocation7] sm:$0xff] %v159
    %162 = vst [vmem:[#allocation7 + $0x8] sm:$0xff] %v160
    // Predicated region
    $region22: #{tpu_custom_call.1} parent=1 // pred_check
      _
    $region23: #{tpu_custom_call.1} parent=1 // pred_check_branch
      %164 = sbr.rel (0) target = $region25
    $region24: #{tpu_custom_call.1} parent=1 // pred_region
      %s166 = ssub.s32 256, 256
      %167 = vsyncadd [#allocation4], %s166
      %s168 = sshll.u32 [#allocation7], 4
      %s169 = int_to_ptr.vmem [resolvable:$true] %s168
      %174 = dma.vmem_to_hbm [thread:$0]  %s169, 256, %s3, [#allocation4], 128, 128, 8
    $region25: #{tpu_custom_call.1} parent=1 // pred_fallthru
      _
    // Predicated region
    $region26: #{tpu_custom_call.1} parent=1 // pred_check
      _
    $region27: #{tpu_custom_call.1} parent=1 // pred_check_branch
      %176 = sbr.rel (0) target = $region29
    $region28: #{tpu_custom_call.1} parent=1 // pred_region
      %177 = dma.done [#allocation4], 256
    $region29: #{tpu_custom_call.1} parent=1 // pred_fallthru
      _
    %178 = vsyncpa [#allocation3], 1
    %179 = vsyncpa [#allocation6], 1
    %180 = vsyncpa [#allocation4], 1

// kernel: tpu_custom_call.1
$region0: #{tpu_custom_call.1}
  #allocation0 [shape = 'u32[]', space=smem, size = 0x4, offset = 0x4, fixed_abs, tag = 'smem constant byte address 0x4 - core index']
  #allocation1 [shape = 'u32[144,128]{1,0:T(1,128)}', space=vmem, size = 0x12000, scoped, tag = 'internal scratch']
  %s0 = inlined_call_operand.hbm [shape: f32[16,128], index: 0, kind: input, shape index: {}]
  %s1 = inlined_call_operand.hbm [shape: bf16[128,128], index: 1, kind: input, shape index: {}]
  %s2 = inlined_call_operand.vmem [shape: f32[1,128], index: 2, kind: input, shape index: {}]
  %s3 = inlined_call_operand.hbm [shape: f32[16,128], index: 3, kind: output, shape index: {}]
  %s4 = sld [smem:[#allocation0]]
  $region30: #{tpu_custom_call.1} parent=0
    _
  %s6 = ssub.s32 1, %s4
  %s7 = scalar_select 0, %s6, %s4
  $region1: #{tpu_custom_call.1} parent=0
    #allocation2 [shape = 'u8[8192]{0}', space=vmem, size = 0x2000, scoped, tag = 'input window, operand 0, single buffered']
    #allocation3 [shape = 's32[1]{0}', space=sflag, size = 0x4, scoped, tag = 'scoped memory for tpu_custom_call.1']
    #allocation4 [shape = 's32[1]{0}', space=sflag, size = 0x4, scoped, tag = 'scoped memory for tpu_custom_call.1']
    #allocation5 [shape = 'u8[32768]{0}', space=vmem, size = 0x8000, scoped, tag = 'input window, operand 1, single buffered']
    #allocation6 [shape = 's32[1]{0}', space=sflag, size = 0x4, scoped, tag = 'scoped memory for tpu_custom_call.1']
    #allocation7 [shape = 'u8[8192]{0}', space=vmem, size = 0x2000, scoped, tag = 'output window, operand 0, single buffered']
    %8 = vsyncpa [#allocation3], 0
    %9 = vsyncpa [#allocation6], 0
    %10 = vsyncpa [#allocation4], 0
    // Predicated region
    $region2: #{tpu_custom_call.1} parent=1 // pred_check
      _
    $region3: #{tpu_custom_call.1} parent=1 // pred_check_branch
      %12 = sbr.rel (0) target = $region5
    $region4: #{tpu_custom_call.1} parent=1 // pred_region
      %s14 = ssub.s32 256, 256
      %15 = vsyncadd [#allocation3], %s14
      %s16 = sshll.u32 [#allocation2], 4
      %s17 = int_to_ptr.vmem [resolvable:$true] %s16
      %22 = dma.hbm_to_vmem [thread:$0]  %s0, 256, %s17, [#allocation3], 128, 128, 8
    $region5: #{tpu_custom_call.1} parent=1 // pred_fallthru
      _
    // Predicated region
    $region6: #{tpu_custom_call.1} parent=1 // pred_check
      _
    $region7: #{tpu_custom_call.1} parent=1 // pred_check_branch
      %24 = sbr.rel (0) target = $region9
    $region8: #{tpu_custom_call.1} parent=1 // pred_region
      %s26 = ssub.s32 1024, 1024
      %27 = vsyncadd [#allocation6], %s26
      %s28 = sshll.u32 [#allocation5], 4
      %s29 = int_to_ptr.vmem [resolvable:$true] %s28
      %34 = dma.hbm_to_vmem [thread:$0]  %s1, 1024, %s29, [#allocation6], 64, 64, 4
    $region9: #{tpu_custom_call.1} parent=1 // pred_fallthru
      _
    // Predicated region
    $region10: #{tpu_custom_call.1} parent=1 // pred_check
      _
    $region11: #{tpu_custom_call.1} parent=1 // pred_check_branch
      %36 = sbr.rel (0) target = $region13
    $region12: #{tpu_custom_call.1} parent=1 // pred_region
      _
    $region13: #{tpu_custom_call.1} parent=1 // pred_fallthru
      _
    // Predicated region
    $region14: #{tpu_custom_call.1} parent=1 // pred_check
      _
    $region15: #{tpu_custom_call.1} parent=1 // pred_check_branch
      %38 = sbr.rel (0) target = $region17
    $region16: #{tpu_custom_call.1} parent=1 // pred_region
      %39 = dma.done [#allocation3], 256
    $region17: #{tpu_custom_call.1} parent=1 // pred_fallthru
      _
    // Predicated region
    $region18: #{tpu_custom_call.1} parent=1 // pred_check
      _
    $region19: #{tpu_custom_call.1} parent=1 // pred_check_branch
      %41 = sbr.rel (0) target = $region21
    $region20: #{tpu_custom_call.1} parent=1 // pred_region
      %42 = dma.done [#allocation6], 1024
    $region21: #{tpu_custom_call.1} parent=1 // pred_fallthru
      _
    %v44 = vld [vmem:[#allocation2] sm:$0xff]
    %v45 = vld [vmem:[#allocation2 + $0x8] sm:$0xff]
    %v46 = vpack.c.bf16 %v45, %v44
    %v47 = vld [vmem:[#allocation5] sm:$0xf]
    %v48 = vld [vmem:[#allocation5 + $0x4] sm:$0xf]
    %v49 = vld [vmem:[#allocation5 + $0x8] sm:$0xf]
    %v50 = vld [vmem:[#allocation5 + $0xc] sm:$0xf]
    %v51 = vld [vmem:[#allocation5 + $0x10] sm:$0xf]
    %v52 = vld [vmem:[#allocation5 + $0x14] sm:$0xf]
    %v53 = vld [vmem:[#allocation5 + $0x18] sm:$0xf]
    %v54 = vld [vmem:[#allocation5 + $0x1c] sm:$0xf]
    %v55 = vld [vmem:[#allocation5 + $0x20] sm:$0xf]
    %v56 = vld [vmem:[#allocation5 + $0x24] sm:$0xf]
    %v57 = vld [vmem:[#allocation5 + $0x28] sm:$0xf]
    %v58 = vld [vmem:[#allocation5 + $0x2c] sm:$0xf]
    %v59 = vld [vmem:[#allocation5 + $0x30] sm:$0xf]
    %v60 = vld [vmem:[#allocation5 + $0x34] sm:$0xf]
    %v61 = vld [vmem:[#allocation5 + $0x38] sm:$0xf]
    %v62 = vld [vmem:[#allocation5 + $0x3c] sm:$0xf]
    %v63 = vld [vmem:[%s2] sm:$0x1]
    %v65 = vlaneseq
    %v66 = vshrl.u32 %v65, 7
    %v67 = vsub.s32 0, %v66
    %v68 = vrot.slane %v63, %v67
    %v86 = vunpack.c.l.b16 %v47
    %v87 = vunpack.c.l.b16 %v48
    %v88 = vunpack.c.l.b16 %v49
    %v89 = vunpack.c.l.b16 %v50
    %v90 = vunpack.c.l.b16 %v51
    %v91 = vunpack.c.l.b16 %v52
    %v92 = vunpack.c.l.b16 %v53
    %v93 = vunpack.c.l.b16 %v54
    %v94 = vunpack.c.l.b16 %v55
    %v95 = vunpack.c.l.b16 %v56
    %v96 = vunpack.c.l.b16 %v57
    %v97 = vunpack.c.l.b16 %v58
    %v98 = vunpack.c.l.b16 %v59
    %v99 = vunpack.c.l.b16 %v60
    %v100 = vunpack.c.l.b16 %v61
    %v101 = vunpack.c.l.b16 %v62
    %v102 = vpack.c.b16 %v87, %v86
    %v103 = vpack.c.b16 %v89, %v88
    %v104 = vpack.c.b16 %v91, %v90
    %v105 = vpack.c.b16 %v93, %v92
    %v106 = vpack.c.b16 %v95, %v94
    %v107 = vpack.c.b16 %v97, %v96
    %v108 = vpack.c.b16 %v99, %v98
    %v109 = vpack.c.b16 %v101, %v100
    %118 = vmatprep.subr.bf16.mxu0 0
    %119 = vmatpush1.bf16.msra.mxu0 %v102
    %120 = vmatprep.subr.bf16.mxu0 0
    %121 = vmatpush1.bf16.msra.mxu0 %v103
    %122 = vmatprep.subr.bf16.mxu0 0
    %123 = vmatpush1.bf16.msra.mxu0 %v104
    %124 = vmatprep.subr.bf16.mxu0 0
    %125 = vmatpush1.bf16.msra.mxu0 %v105
    %126 = vmatprep.subr.bf16.mxu0 0
    %127 = vmatpush1.bf16.msra.mxu0 %v106
    %128 = vmatprep.subr.bf16.mxu0 0
    %129 = vmatpush1.bf16.msra.mxu0 %v107
    %130 = vmatprep.subr.bf16.mxu0 0
    %131 = vmatpush1.bf16.msra.mxu0 %v108
    %132 = vmatprep.subr.bf16.mxu0 0
    %133 = vmatpush1.bf16.msra.mxu0 %v109
    %134 = vmatprep.subr.bf16.mxu0 0
    %135 = vmatpush1.bf16.msra.mxu0 0
    %136 = vmatprep.subr.bf16.mxu0 0
    %137 = vmatpush1.bf16.msra.mxu0 0
    %138 = vmatprep.subr.bf16.mxu0 0
    %139 = vmatpush1.bf16.msra.mxu0 0
    %140 = vmatprep.subr.bf16.mxu0 0
    %141 = vmatpush1.bf16.msra.mxu0 0
    %142 = vmatprep.subr.bf16.mxu0 0
    %143 = vmatpush1.bf16.msra.mxu0 0
    %144 = vmatprep.subr.bf16.mxu0 0
    %145 = vmatpush1.bf16.msra.mxu0 0
    %146 = vmatprep.subr.bf16.mxu0 0
    %147 = vmatpush1.bf16.msra.mxu0 0
    %148 = vmatprep.subr.bf16.mxu0 0
    %149 = vmatpush1.bf16.msra.mxu0 0
    %150 = vmatprep.mubr.bf16.mxu0 0
    %151 = vmatmul.mubr.bf16.gmra.mrb[0].mxu0 %v46
    %v152 = vpop.f32.mrb[0].mxu0
    %v153 = vadd.f32 %v68, %v152
    %v154 = vpop.f32.mrb[0].mxu0
    %v155 = vpop.f32.mrb[0].mxu0
    %v156 = vadd.f32 %v68, %v155
    %v157 = vpop.f32.mrb[0].mxu0
    %158 = vdwg.mxu0
    %v159 = vmax.f32 %v153, 0.0
    %v160 = vmax.f32 %v156, 0.0
    %161 = vst [vmem:[#allocation7] sm:$0xff] %v159
    %162 = vst [vmem:[#allocation7 + $0x8] sm:$0xff] %v160
    // Predicated region
    $region22: #{tpu_custom_call.1} parent=1 // pred_check
      _
    $region23: #{tpu_custom_call.1} parent=1 // pred_check_branch
      %164 = sbr.rel (0) target = $region25
    $region24: #{tpu_custom_call.1} parent=1 // pred_region
      %s166 = ssub.s32 256, 256
      %167 = vsyncadd [#allocation4], %s166
      %s168 = sshll.u32 [#allocation7], 4
      %s169 = int_to_ptr.vmem [resolvable:$true] %s168
      %174 = dma.vmem_to_hbm [thread:$0]  %s169, 256, %s3, [#allocation4], 128, 128, 8
    $region25: #{tpu_custom_call.1} parent=1 // pred_fallthru
      _
    // Predicated region
    $region26: #{tpu_custom_call.1} parent=1 // pred_check
      _
    $region27: #{tpu_custom_call.1} parent=1 // pred_check_branch
      %176 = sbr.rel (0) target = $region29
    $region28: #{tpu_custom_call.1} parent=1 // pred_region
      %177 = dma.done [#allocation4], 256
    $region29: #{tpu_custom_call.1} parent=1 // pred_fallthru
      _
    %178 = vsyncpa [#allocation3], 1
    %179 = vsyncpa [#allocation6], 1
    %180 = vsyncpa [#allocation4], 1

</llo_original>
